<compile_context>
chip_gen: v5e
topology: v5e:2x2
jax: 0.10.0
libtpu: 0.0.40
codegen_flags: <defaults>
</compile_context>

<pallas_src>
import jax
import jax.numpy as jnp
from jax.experimental import pallas as pl
from jax.experimental.pallas import tpu as pltpu


def _round_up(x, m):
    return ((x + m - 1) // m) * m


def _conv_bn_relu_kernel(p_ref, w_ref, b_ref, o_ref):
    """One (M-tile, OC-tile) of: out = relu(patches @ (w * scale) + bias).

    p_ref : (TM, K)   compute dtype (bf16), streamed per M step
    w_ref : (K, TN)   compute dtype, BN scale pre-folded, resident per OC tile
    b_ref : (1, TN)   f32 folded bias (conv bias + BN shift), resident
    o_ref : (TM, TN)  out dtype (bf16 by default), lane-dense (TN % 128 == 0)
    """
    acc = jnp.dot(p_ref[...], w_ref[...], preferred_element_type=jnp.float32)
    o_ref[...] = jnp.maximum(acc + b_ref[...], 0.0).astype(o_ref.dtype)


def basic_conv2d(x, conv_w, conv_b, bn_gamma, bn_beta, bn_mean, bn_var,
                 *, eps=1e-5, stride=1, padding=0, tm=None,
                 compute_dtype=jnp.bfloat16, out_dtype=None, out_format="NCHW"):
    """Forward of BasicConv2d (eval-mode BN). x: (N, C, H, W) float32.

    Returns (N, OC, OH, OW) if out_format == "NCHW" (PyTorch semantics; pays
    one extra HBM pass for the layout transpose); "NHWC" skips it.
    """
    N, C, H, W = x.shape
    OC, Cw, KH, KW = conv_w.shape
    assert Cw == C, "grouped conv not supported"
    out_dtype = compute_dtype if out_dtype is None else out_dtype

    # Spatial zero padding (PyTorch Conv2d `padding` semantics).
    if padding:
        x = jnp.pad(x, ((0, 0), (0, 0), (padding, padding), (padding, padding)))
    Hp, Wp = H + 2 * padding, W + 2 * padding
    OH = (Hp - KH) // stride + 1
    OW = (Wp - KW) // stride + 1

    # NCHW -> NHWC once, cast to compute dtype BEFORE the im2col expansion so
    # the 9x-expanded operand is half-width off-chip.  K ordered (kh, kw, c).
    x_nhwc = jnp.transpose(x, (0, 2, 3, 1)).astype(compute_dtype)   # (N,Hp,Wp,C)
    pieces = []
    for kh in range(KH):
        for kw in range(KW):
            pieces.append(
                x_nhwc[:, kh:kh + stride * (OH - 1) + 1:stride,
                          kw:kw + stride * (OW - 1) + 1:stride, :])
    patches = jnp.concatenate(pieces, axis=-1)                       # (N,OH,OW,K)
    K = KH * KW * C
    M = N * OH * OW
    patches = patches.reshape(M, K)

    # Output-channel lane padding: 128 min; 256-granularity for OC > 128
    # (v6e/v7x MXU is 2x256^2).  Tile OC at <=256 so large-OC layers keep TM
    # big instead of growing the resident weight / output footprint.
    OCp = 128 if OC <= 128 else _round_up(OC, 256)
    TN = OCp if OCp <= 512 else 256
    n_oc = OCp // TN

    # Fold conv bias + eval-mode BN: scale goes into the weights (f32, then
    # cast), bias stays a separate f32 row.  relu((p@w)*s+b) == relu(p@(w*s)+b).
    inv_std = 1.0 / jnp.sqrt(bn_var.astype(jnp.float32) + eps)
    scale = bn_gamma.astype(jnp.float32) * inv_std
    bias = bn_beta.astype(jnp.float32) + scale * (
        conv_b.astype(jnp.float32) - bn_mean.astype(jnp.float32))

    w2d = jnp.transpose(conv_w, (2, 3, 1, 0)).reshape(K, OC).astype(jnp.float32)
    w2d = w2d * scale[None, :]
    w2d = jnp.pad(w2d, ((0, 0), (0, OCp - OC))).astype(compute_dtype)
    bias_row = jnp.pad(bias, (0, OCp - OC)).reshape(1, OCp).astype(jnp.float32)

    # Generation-aware VMEM budget: ~75% of physical per-core VMEM
    # (~96 MiB on v5e/v6e, ~48 MiB on v7x).
    in_bytes = jnp.dtype(compute_dtype).itemsize
    out_bytes = jnp.dtype(out_dtype).itemsize
    try:
        phys_vmem = int(getattr(pltpu.get_tpu_info(), "vmem_capacity_bytes",
                                64 << 20))
    except Exception:
        phys_vmem = 64 << 20
    vmem_budget = phys_vmem * 3 // 4

    fixed = 2 * K * TN * in_bytes + 2 * TN * 4          # weights + bias (db)
    per_row = 2 * K * in_bytes + 2 * TN * out_bytes     # patch + output (db)
    if tm is None:
        tm = max(256, min((vmem_budget - fixed) // per_row, 2048))
    TM = max(8, (min(int(tm), _round_up(M, 8)) // 8) * 8)
    Mp = _round_up(M, TM)
    if Mp != M:
        patches = jnp.pad(patches, ((0, Mp - M), (0, 0)))
    grid = (Mp // TM, n_oc)

    footprint = (2 * TM * K * in_bytes + 2 * K * TN * in_bytes
                 + 2 * TN * 4 + 2 * TM * TN * out_bytes)
    vmem_limit = int(min(vmem_budget, max(2 * footprint, 16 << 20)))

    cost = pl.CostEstimate(
        flops=2 * Mp * K * OCp,
        transcendentals=0,
        bytes_accessed=(Mp * K * in_bytes + (Mp // TM) * K * OCp * in_bytes
                        + OCp * 4 + Mp * OCp * out_bytes))

    out2d = pl.pallas_call(
        _conv_bn_relu_kernel,
        out_shape=jax.ShapeDtypeStruct((Mp, OCp), out_dtype),
        grid_spec=pltpu.PrefetchScalarGridSpec(
            num_scalar_prefetch=0,
            grid=grid,
            in_specs=[
                pl.BlockSpec((TM, K), lambda i, j: (i, 0)),   # streamed patches
                pl.BlockSpec((K, TN), lambda i, j: (0, j)),   # scaled weights
                pl.BlockSpec((1, TN), lambda i, j: (0, j)),   # folded bias
            ],
            out_specs=pl.BlockSpec((TM, TN), lambda i, j: (i, j)),
        ),
        compiler_params=pltpu.CompilerParams(
            dimension_semantics=("parallel", "parallel"),  # megacore-friendly
            vmem_limit_bytes=vmem_limit,
            allow_input_fusion=[True, False, False],
        ),
        cost_estimate=cost,
    )(patches, w2d, bias_row)

    # Padded M rows hold relu(bias) and padded OC columns hold relu(0); this
    # slice is what makes the result correct — keep it if layout ever changes.
    out = out2d[:M, :OC].reshape(N, OH, OW, OC)
    if out_format == "NHWC":
        return out
    return jnp.transpose(out, (0, 3, 1, 2))                          # NCHW


if __name__ == "__main__":
    # Module config: input_channels=4, output_channels=8, kernel_size=3
    N, C, H, W = 2, 4, 16, 16
    OC, KH, KW = 8, 3, 3

    key = jax.random.PRNGKey(0)
    k_x, k_w, k_b, k_g, k_beta = jax.random.split(key, 5)

    x = jax.random.normal(k_x, (N, C, H, W), dtype=jnp.float32)
    conv_w = jax.random.normal(k_w, (OC, C, KH, KW), dtype=jnp.float32) * 0.1
    conv_b = jax.random.normal(k_b, (OC,), dtype=jnp.float32) * 0.1
    bn_gamma = jnp.ones((OC,), dtype=jnp.float32) + 0.01 * jax.random.normal(k_g, (OC,))
    bn_beta = 0.01 * jax.random.normal(k_beta, (OC,), dtype=jnp.float32)
    bn_mean = jnp.zeros((OC,), dtype=jnp.float32)   # deterministic running stats
    bn_var = jnp.ones((OC,), dtype=jnp.float32)

    # tm=128 so the toy M=392 still exercises a multi-step pipelined grid.
    out = basic_conv2d(x, conv_w, conv_b, bn_gamma, bn_beta, bn_mean, bn_var,
                       tm=128)
    out = jax.block_until_ready(out)

    # Reference with plain JAX in f32 (same math path, lax conv).
    ref = jax.lax.conv_general_dilated(
        x, conv_w, window_strides=(1, 1), padding="VALID",
        dimension_numbers=("NCHW", "OIHW", "NCHW"))
    ref = ref + conv_b.reshape(1, OC, 1, 1)
    inv_std = 1.0 / jnp.sqrt(bn_var + 1e-5)
    ref = (ref - bn_mean.reshape(1, OC, 1, 1)) * (bn_gamma * inv_std).reshape(1, OC, 1, 1) \
          + bn_beta.reshape(1, OC, 1, 1)
    ref = jnp.maximum(ref, 0.0)

    assert out.shape == (N, OC, H - KH + 1, W - KW + 1)
    # bf16 matmul operands + bf16 output store (f32 accumulation) vs f32 ref.
    out_f32 = out.astype(jnp.float32)
    assert jnp.allclose(out_f32, ref, atol=5e-2, rtol=5e-2), \
        f"max abs err {jnp.max(jnp.abs(out_f32 - ref))}"
    print("KERNEL_OK")
</pallas_src>

<mosaic_0001>
module attributes {stable_mosaic.version = 11 : i64} {
  func.func @_conv_bn_relu_kernel(%arg0: i32, %arg1: i32, %arg2: memref<128x36xbf16, #tpu.memory_space<vmem>>, %arg3: memref<36x128xbf16, #tpu.memory_space<vmem>>, %arg4: memref<1x128xf32, #tpu.memory_space<vmem>>, %arg5: memref<128x128xbf16, #tpu.memory_space<vmem>>) attributes {dimension_semantics = [#tpu.dimension_semantics<parallel>, #tpu.dimension_semantics<parallel>], iteration_bounds = array<i64: 4, 1>, scalar_prefetch = 0 : i64, scratch_operands = 0 : i64, tpu.core_type = #tpu.core_type<tc>, window_params = [{transform_indices = @transform_0, window_bounds = array<i64: 128, 36>}, {transform_indices = @transform_1, window_bounds = array<i64: 36, 128>}, {transform_indices = @transform_2, window_bounds = array<i64: 1, 128>}, {transform_indices = @transform_3, window_bounds = array<i64: 128, 128>}]} {
    %c0 = arith.constant 0 : index
    %c0_0 = arith.constant 0 : index
    %0 = vector.load %arg2[%c0, %c0_0] : memref<128x36xbf16, #tpu.memory_space<vmem>>, vector<128x36xbf16>
    %c0_1 = arith.constant 0 : index
    %c0_2 = arith.constant 0 : index
    %1 = vector.load %arg3[%c0_1, %c0_2] : memref<36x128xbf16, #tpu.memory_space<vmem>>, vector<36x128xbf16>
    %cst = arith.constant dense<0.000000e+00> : vector<128x128xf32>
    %2 = tpu.matmul %0, %1, %cst {dimension_numbers = #tpu.dot_dimension_numbers<[1], [0], [0], [1], [0, 0, 1, 1], [], []>} : vector<128x36xbf16>, vector<36x128xbf16>, vector<128x128xf32> -> vector<128x128xf32>
    %c0_3 = arith.constant 0 : index
    %c0_4 = arith.constant 0 : index
    %3 = vector.load %arg4[%c0_3, %c0_4] : memref<1x128xf32, #tpu.memory_space<vmem>>, vector<1x128xf32>
    %4 = vector.broadcast %3 : vector<1x128xf32> to vector<128x128xf32>
    %5 = arith.addf %2, %4 : vector<128x128xf32>
    %cst_5 = arith.constant 0.000000e+00 : f32
    %6 = vector.broadcast %cst_5 : f32 to vector<128x128xf32>
    %7 = arith.maximumf %5, %6 : vector<128x128xf32>
    %8 = arith.truncf %7 : vector<128x128xf32> to vector<128x128xbf16>
    %c0_6 = arith.constant 0 : index
    %c0_7 = arith.constant 0 : index
    %9 = vector.load %arg5[%c0_6, %c0_7] : memref<128x128xbf16, #tpu.memory_space<vmem>>, vector<128x128xbf16>
    tpu.vector_store %arg5[%c0_6, %c0_7], %8 {strides = array<i32>} : memref<128x128xbf16, #tpu.memory_space<vmem>>, vector<128x128xbf16>,
    return
  }
  func.func @transform_0(%arg0: i32, %arg1: i32) -> (i32, i32) {
    %c0_i32 = arith.constant 0 : i32
    %c0_i32_0 = arith.constant 0 : i32
    return %arg0, %c0_i32 : i32, i32
  }
  func.func @transform_1(%arg0: i32, %arg1: i32) -> (i32, i32) {
    %c0_i32 = arith.constant 0 : i32
    %c0_i32_0 = arith.constant 0 : i32
    return %c0_i32, %arg1 : i32, i32
  }
  func.func @transform_2(%arg0: i32, %arg1: i32) -> (i32, i32) {
    %c0_i32 = arith.constant 0 : i32
    %c0_i32_0 = arith.constant 0 : i32
    return %c0_i32, %arg1 : i32, i32
  }
  func.func @transform_3(%arg0: i32, %arg1: i32) -> (i32, i32) {
    %c0_i32 = arith.constant 0 : i32
    return %arg0, %arg1 : i32, i32
  }
}

</mosaic_0001>

<llo_original>
// kernel: tpu_custom_call.1
$region0: #{tpu_custom_call.1}
  #allocation0 [shape = 'u32[]', space=smem, size = 0x4, offset = 0x4, fixed_abs, tag = 'smem constant byte address 0x4 - core index']
  #allocation1 [shape = 'u32[72,128]{1,0:T(1,128)}', space=vmem, size = 0x9000, scoped, tag = 'internal scratch']
  %s0 = inlined_call_operand.vmem [shape: bf16[512,36], index: 0, kind: input, shape index: {}]
  %s1 = inlined_call_operand.vmem [shape: bf16[36,128], index: 1, kind: input, shape index: {}]
  %s2 = inlined_call_operand.vmem [shape: f32[1,128], index: 2, kind: input, shape index: {}]
  %s3 = inlined_call_operand.hbm [shape: bf16[512,128], index: 3, kind: output, shape index: {}]
  %s4 = sld [smem:[#allocation0]]
  $region45: #{tpu_custom_call.1} parent=0
    _
  %s6 = ssub.s32 1, %s4
  %s7 = scalar_select 0, %s6, %s4
  $region1: #{tpu_custom_call.1} parent=0
    #allocation2 [shape = 'u8[65536]{0}', space=vmem, size = 0x10000, scoped, tag = 'output window, operand 0']
    #allocation3 [shape = 's32[2]{0}', space=sflag, size = 0x8, scoped, tag = 'scoped memory for tpu_custom_call.1']
    %8 = vsyncpa [#allocation3], 0
    %s9 = scalar_lea.sflag [#allocation3], 1
    %10 = vsyncpa %s9, 0
    loop: start=0, step=1, limit=6
    $region2: #{tpu_custom_call.1} parent=1 // loop_pre_header
      _
    $region3: #{tpu_custom_call.1} parent=1 // loop_header
      %s12 = sphi 0, %s16
      %p13 = scmp.ge.s32.totalorder %s12, 6
      %s19 = sphi 0, %s31
      %s20 = sphi 0, %s27
      %s21 = sphi 0, %s19
      %s22 = sphi 0, %s20
      %s23 = sphi 0, %s21
      %s24 = sphi 0, %s22
      %s34 = sphi 0, %s36
      %s37 = sphi 0, %s34
      %s38 = sphi 0, %s37
      %s54 = sphi 0, %s38
      %s60 = sphi 0, %s62
      %s63 = sphi 0, %s60
      %s64 = sphi 0, %s63
      %s80 = sphi 0, %s64
      %s86 = sphi 0, %s88
      %s89 = sphi 0, %s86
      %s90 = sphi 0, %s89
      %s106 = sphi 0, %s90
      %s114 = sphi 0, %s116
      %s117 = sphi 0, %s114
      %s118 = sphi 0, %s117
      %s134 = sphi 0, %s118
    $region4: #{tpu_custom_call.1} parent=1 // loop_header_branch
      %15 = sbr.rel (%p13) target = $region8
    $region5: #{tpu_custom_call.1} parent=1 // loop_body
      %s17 = ssub.s32 %s12, 1
      %s18 = ssub.s32 %s12, 2
      %s25 = sadd.s32 1, %s20
      %p26 = scmp.ge.s32.totalorder %s25, 1
      %s27 = scalar_select %p26, 0, %s25
      %s28 = sadd.s32 1, %s19
      %s29 = scalar_select %p26, %s28, %s19
      %p30 = scmp.ge.s32.totalorder %s29, 4
      %s31 = scalar_select %p30, 0, %s29
      %s32 = ssub.s32 %s19, %s31
      %p33 = scmp.eq.s32.totalorder %s32, 0
      %s35 = sadd.s32 %s34, 1
      %s36 = scalar_select %p33, %s34, %s35
      %p39 = pneg %p33
      %p40 = scmp.eq.s32.totalorder %s12, 3
      %p41 = por %p39, %p40
      %p42 = scmp.ne.s32.totalorder %s34, %s37
      %p43 = scmp.eq.s32.totalorder %s12, 0
      %p44 = por %p42, %p43
      %p45 = scmp.ne.s32.totalorder %s34, %s37
      %p46 = scmp.eq.s32.totalorder %s17, 3
      %p47 = por %p45, %p46
      %p48 = scmp.ne.s32.totalorder %s37, %s38
      %p49 = scmp.eq.s32.totalorder %s17, 0
      %p50 = por %p48, %p49
      %p51 = scmp.ne.s32.totalorder %s37, %s38
      %p52 = scmp.eq.s32.totalorder %s18, 3
      %p53 = por %p51, %p52
      %p55 = scmp.ne.s32.totalorder %s38, %s54
      %p56 = scmp.eq.s32.totalorder %s18, 0
      %p57 = por %p55, %p56
      %s58 = ssub.s32 %s20, %s27
      %p59 = scmp.eq.s32.totalorder %s58, 0
      %s61 = sadd.s32 %s60, 1
      %s62 = scalar_select %p59, %s60, %s61
      %p65 = pneg %p59
      %p66 = scmp.eq.s32.totalorder %s12, 3
      %p67 = por %p65, %p66
      %p68 = scmp.ne.s32.totalorder %s60, %s63
      %p69 = scmp.eq.s32.totalorder %s12, 0
      %p70 = por %p68, %p69
      %p71 = scmp.ne.s32.totalorder %s60, %s63
      %p72 = scmp.eq.s32.totalorder %s17, 3
      %p73 = por %p71, %p72
      %p74 = scmp.ne.s32.totalorder %s63, %s64
      %p75 = scmp.eq.s32.totalorder %s17, 0
      %p76 = por %p74, %p75
      %p77 = scmp.ne.s32.totalorder %s63, %s64
      %p78 = scmp.eq.s32.totalorder %s18, 3
      %p79 = por %p77, %p78
      %p81 = scmp.ne.s32.totalorder %s64, %s80
      %p82 = scmp.eq.s32.totalorder %s18, 0
      %p83 = por %p81, %p82
      %s84 = ssub.s32 %s20, %s27
      %p85 = scmp.eq.s32.totalorder %s84, 0
      %s87 = sadd.s32 %s86, 1
      %s88 = scalar_select %p85, %s86, %s87
      %p91 = pneg %p85
      %p92 = scmp.eq.s32.totalorder %s12, 3
      %p93 = por %p91, %p92
      %p94 = scmp.ne.s32.totalorder %s86, %s89
      %p95 = scmp.eq.s32.totalorder %s12, 0
      %p96 = por %p94, %p95
      %p97 = scmp.ne.s32.totalorder %s86, %s89
      %p98 = scmp.eq.s32.totalorder %s17, 3
      %p99 = por %p97, %p98
      %p100 = scmp.ne.s32.totalorder %s89, %s90
      %p101 = scmp.eq.s32.totalorder %s17, 0
      %p102 = por %p100, %p101
      %p103 = scmp.ne.s32.totalorder %s89, %s90
      %p104 = scmp.eq.s32.totalorder %s18, 3
      %p105 = por %p103, %p104
      %p107 = scmp.ne.s32.totalorder %s90, %s106
      %p108 = scmp.eq.s32.totalorder %s18, 0
      %p109 = por %p107, %p108
      %s110 = ssub.s32 %s19, %s31
      %s111 = ssub.s32 %s20, %s27
      %s112 = sor.u32 %s110, %s111
      %p113 = scmp.eq.s32.totalorder %s112, 0
      %s115 = sadd.s32 %s114, 1
      %s116 = scalar_select %p113, %s114, %s115
      %p119 = pneg %p113
      %p120 = scmp.eq.s32.totalorder %s12, 3
      %p121 = por %p119, %p120
      %p122 = scmp.ne.s32.totalorder %s114, %s117
      %p123 = scmp.eq.s32.totalorder %s12, 0
      %p124 = por %p122, %p123
      %p125 = scmp.ne.s32.totalorder %s114, %s117
      %p126 = scmp.eq.s32.totalorder %s17, 3
      %p127 = por %p125, %p126
      %p128 = scmp.ne.s32.totalorder %s117, %s118
      %p129 = scmp.eq.s32.totalorder %s17, 0
      %p130 = por %p128, %p129
      %p131 = scmp.ne.s32.totalorder %s117, %s118
      %p132 = scmp.eq.s32.totalorder %s18, 3
      %p133 = por %p131, %p132
      %p135 = scmp.ne.s32.totalorder %s118, %s134
      %p136 = scmp.eq.s32.totalorder %s18, 0
      %p137 = por %p135, %p136
      %p138 = scmp.le.s32.totalorder 1, %s12
      %p139 = scmp.lt.s32.totalorder %s12, 5
      %p140 = pnand %p138, %p139
      %p141 = pneg %p140
      // Predicated region
      $region9: #{tpu_custom_call.1} parent=5 // pred_check
        _
      $region10: #{tpu_custom_call.1} parent=5 // pred_check_branch
        %143 = sbr.rel (%p140) target = $region12
      $region11: #{tpu_custom_call.1} parent=5 // pred_region
        %s144 = ssub.s32 %s12, 1
        // Predicated region
        $region13: #{tpu_custom_call.1} parent=11 // pred_check
          %p145 = pneg %p76
        $region14: #{tpu_custom_call.1} parent=11 // pred_check_branch
          %147 = sbr.rel (%p145) target = $region16
        $region15: #{tpu_custom_call.1} parent=11 // pred_region
          %p148 = scmp.lt.s32.totalorder %s22, 0
          %s149 = scalar_select %p148, %s22, 0
          %s150 = smul.addr %s149, 4
          %s151 = scalar_lea.vmem %s1, %s150
        $region16: #{tpu_custom_call.1} parent=11 // pred_fallthru
          _
        // Predicated region
        $region17: #{tpu_custom_call.1} parent=11 // pred_check
          %p152 = pneg %p102
        $region18: #{tpu_custom_call.1} parent=11 // pred_check_branch
          %154 = sbr.rel (%p152) target = $region20
        $region19: #{tpu_custom_call.1} parent=11 // pred_region
          %p155 = scmp.lt.s32.totalorder %s22, 0
          %s156 = scalar_select %p155, %s22, 0
          %s157 = scalar_lea.vmem %s2, %s156
        $region20: #{tpu_custom_call.1} parent=11 // pred_fallthru
          _
      $region12: #{tpu_custom_call.1} parent=5 // pred_fallthru
        _
      %p158 = scmp.lt.s32.totalorder %s12, 4
      // Predicated region
      $region21: #{tpu_custom_call.1} parent=5 // pred_check
        %p159 = pneg %p158
      $region22: #{tpu_custom_call.1} parent=5 // pred_check_branch
        %161 = sbr.rel (%p159) target = $region24
      $region23: #{tpu_custom_call.1} parent=5 // pred_region
        // Predicated region
        $region25: #{tpu_custom_call.1} parent=23 // pred_check
          %p162 = pneg %p44
        $region26: #{tpu_custom_call.1} parent=23 // pred_check_branch
          %164 = sbr.rel (%p162) target = $region28
        $region27: #{tpu_custom_call.1} parent=23 // pred_region
          %s165 = smul.u32 16, %s19
          %p166 = scmp.lt.s32.totalorder %s165, 63
          %s167 = scalar_select %p166, %s165, 63
          %s168 = smul.addr %s167, 4
          %s169 = scalar_lea.vmem %s0, %s168
          %s170 = smul.u32 16, %s19
        $region28: #{tpu_custom_call.1} parent=23 // pred_fallthru
          _
      $region24: #{tpu_custom_call.1} parent=5 // pred_fallthru
        _
      %p171 = scmp.le.s32.totalorder 1, %s12
      %p172 = scmp.lt.s32.totalorder %s12, 5
      %p173 = pnand %p171, %p172
      %p174 = pneg %p173
      // Predicated region
      $region29: #{tpu_custom_call.1} parent=5 // pred_check
        _
      $region30: #{tpu_custom_call.1} parent=5 // pred_check_branch
        %176 = sbr.rel (%p173) target = $region32
      $region31: #{tpu_custom_call.1} parent=5 // pred_region
        %s177 = ssub.s32 %s12, 1
        %s178 = smul.u32 16, %s21
        %p179 = scmp.lt.s32.totalorder %s178, 63
        %s180 = scalar_select %p179, %s178, 63
        %s181 = smul.addr %s180, 4
        %s182 = scalar_lea.vmem %s0, %s181
        %p183 = pneg %p50
        %p184 = pneg %p47
        %p185 = scmp.lt.s32.totalorder %s22, 0
        %s186 = scalar_select %p185, %s22, 0
        %s187 = smul.addr %s186, 4
        %s188 = scalar_lea.vmem %s1, %s187
        %p189 = pneg %p76
        %p190 = pneg %p73
        %p191 = scmp.lt.s32.totalorder %s22, 0
        %s192 = scalar_select %p191, %s22, 0
        %s193 = scalar_lea.vmem %s2, %s192
        %p194 = pneg %p102
        %p195 = pneg %p99
        %p196 = pneg %p130
        %p197 = pneg %p127
        %s198 = sand.u32 %s117, 1
        %s199 = scalar_lea.sflag [#allocation3], %s198
        %s200 = sand.u32 %s117, 1
        %s201 = smul.addr %s200, 64
        %s202 = scalar_lea.vmem [#allocation2], %s201
        %s203 = smul.u32 16, %s21
        %p204 = scmp.lt.s32.totalorder %s203, 63
        %s205 = scalar_select %p204, %s203, 63
        %s206 = smul.addr %s205, 4
        %s207 = scalar_lea.vmem %s0, %s206
        %s208 = smul.u32 16, %s21
        %p209 = scmp.lt.s32.totalorder %s22, 0
        %s210 = scalar_select %p209, %s22, 0
        %s211 = smul.addr %s210, 4
        %s212 = scalar_lea.vmem %s1, %s211
        %p213 = scmp.lt.s32.totalorder %s22, 0
        %s214 = scalar_select %p213, %s22, 0
        %s215 = scalar_lea.vmem %s2, %s214
        %s216 = smul.u32 16, %s21
        %v218 = vld [vmem:[%s207] sm:$0xf]
        %v219 = vld [vmem:[%s207 + $0x4] sm:$0xf]
        %v220 = vld [vmem:[%s207 + $0x8] sm:$0xf]
        %v221 = vld [vmem:[%s207 + $0xc] sm:$0xf]
        %v222 = vld [vmem:[%s207 + $0x10] sm:$0xf]
        %v223 = vld [vmem:[%s207 + $0x14] sm:$0xf]
        %v224 = vld [vmem:[%s207 + $0x18] sm:$0xf]
        %v225 = vld [vmem:[%s207 + $0x1c] sm:$0xf]
        %v226 = vld [vmem:[%s207 + $0x20] sm:$0xf]
        %v227 = vld [vmem:[%s207 + $0x24] sm:$0xf]
        %v228 = vld [vmem:[%s207 + $0x28] sm:$0xf]
        %v229 = vld [vmem:[%s207 + $0x2c] sm:$0xf]
        %v230 = vld [vmem:[%s207 + $0x30] sm:$0xf]
        %v231 = vld [vmem:[%s207 + $0x34] sm:$0xf]
        %v232 = vld [vmem:[%s207 + $0x38] sm:$0xf]
        %v233 = vld [vmem:[%s207 + $0x3c] sm:$0xf]
        %v234 = vld [vmem:[%s212] sm:$0xf]
        %v235 = vld [vmem:[%s212 + $0x4] sm:$0xf]
        %v236 = vld [vmem:[%s212 + $0x8] sm:$0xf]
        %v237 = vld [vmem:[%s212 + $0xc] sm:$0xf]
        %v238 = vld [vmem:[%s212 + $0x10] sm:$0x3]
        %v239 = vld [vmem:[%s215] sm:$0x1]
        %v241 = vperm.slane %v239, 0
        %v259 = vunpack.c.l.b16 %v218
        %v260 = vunpack.c.l.b16 %v219
        %v261 = vunpack.c.l.b16 %v220
        %v262 = vunpack.c.l.b16 %v221
        %v263 = vunpack.c.l.b16 %v222
        %v264 = vunpack.c.l.b16 %v223
        %v265 = vunpack.c.l.b16 %v224
        %v266 = vunpack.c.l.b16 %v225
        %v267 = vunpack.c.l.b16 %v226
        %v268 = vunpack.c.l.b16 %v227
        %v269 = vunpack.c.l.b16 %v228
        %v270 = vunpack.c.l.b16 %v229
        %v271 = vunpack.c.l.b16 %v230
        %v272 = vunpack.c.l.b16 %v231
        %v273 = vunpack.c.l.b16 %v232
        %v274 = vunpack.c.l.b16 %v233
        %v275 = vpack.c.b16 %v260, %v259
        %v276 = vpack.c.b16 %v262, %v261
        %v277 = vpack.c.b16 %v264, %v263
        %v278 = vpack.c.b16 %v266, %v265
        %v279 = vpack.c.b16 %v268, %v267
        %v280 = vpack.c.b16 %v270, %v269
        %v281 = vpack.c.b16 %v272, %v271
        %v282 = vpack.c.b16 %v274, %v273
        %v288 = vunpack.c.l.b16 %v234
        %v289 = vunpack.c.l.b16 %v235
        %v290 = vunpack.c.l.b16 %v236
        %v291 = vunpack.c.l.b16 %v237
        %v292 = vunpack.c.l.b16 %v238
        %v293 = vpack.c.b16 %v289, %v288
        %v294 = vpack.c.b16 %v291, %v290
        %v295 = vpack.c.b16 %v292, %v292
        %vm298 = vcmask 293888
        %v300 = vsel %vm298, %v275, 0
        %v303 = vsel %vm298, %v276, 0
        %v306 = vsel %vm298, %v277, 0
        %v309 = vsel %vm298, %v278, 0
        %v312 = vsel %vm298, %v279, 0
        %v315 = vsel %vm298, %v280, 0
        %v318 = vsel %vm298, %v281, 0
        %v321 = vsel %vm298, %v282, 0
        %vm323 = vcmask 1041408
        %v325 = vsel %vm323, %v295, 0
        %327 = vmatpush.bf16.msra.mxu0 0
        %328 = vmatpush.bf16.msra.mxu0 0
        %329 = vmatpush.bf16.msra.mxu0 0
        %330 = vmatpush.bf16.msra.mxu0 0
        %331 = vmatpush.bf16.msra.mxu0 0
        %332 = vmatpush.bf16.msra.mxu0 %v325
        %333 = vmatpush.bf16.msra.mxu0 %v294
        %334 = vmatpush.bf16.msra.mxu0 %v293
        %335 = vmatmul.bf16.gmra.mxu0 %v300
        %v336 = vpop.f32.mrf.mxu0
        %v337 = vadd.f32 %v241, %v336
        %v338 = vpop.f32.mrf.mxu0
        %v339 = vadd.f32 %v241, %v338
        %340 = vmatmul.bf16.gmra.mxu0 %v303
        %v341 = vpop.f32.mrf.mxu0
        %v342 = vadd.f32 %v241, %v341
        %v343 = vpop.f32.mrf.mxu0
        %v344 = vadd.f32 %v241, %v343
        %345 = vmatmul.bf16.gmra.mxu0 %v306
        %v346 = vpop.f32.mrf.mxu0
        %v347 = vadd.f32 %v241, %v346
        %v348 = vpop.f32.mrf.mxu0
        %v349 = vadd.f32 %v241, %v348
        %350 = vmatmul.bf16.gmra.mxu0 %v309
        %v351 = vpop.f32.mrf.mxu0
        %v352 = vadd.f32 %v241, %v351
        %v353 = vpop.f32.mrf.mxu0
        %v354 = vadd.f32 %v241, %v353
        %355 = vmatmul.bf16.gmra.mxu0 %v312
        %v356 = vpop.f32.mrf.mxu0
        %v357 = vadd.f32 %v241, %v356
        %v358 = vpop.f32.mrf.mxu0
        %v359 = vadd.f32 %v241, %v358
        %360 = vmatmul.bf16.gmra.mxu0 %v315
        %v361 = vpop.f32.mrf.mxu0
        %v362 = vadd.f32 %v241, %v361
        %v363 = vpop.f32.mrf.mxu0
        %v364 = vadd.f32 %v241, %v363
        %365 = vmatmul.bf16.gmra.mxu0 %v318
        %v366 = vpop.f32.mrf.mxu0
        %v367 = vadd.f32 %v241, %v366
        %v368 = vpop.f32.mrf.mxu0
        %v369 = vadd.f32 %v241, %v368
        %370 = vmatmul.bf16.gmra.mxu0 %v321
        %v371 = vpop.f32.mrf.mxu0
        %v372 = vadd.f32 %v241, %v371
        %v373 = vpop.f32.mrf.mxu0
        %v374 = vadd.f32 %v241, %v373
        %375 = vdwg.mxu0
        %v376 = vmax.f32 %v337, 0.0
        %v377 = vmax.f32 %v339, 0.0
        %v378 = vmax.f32 %v342, 0.0
        %v379 = vmax.f32 %v344, 0.0
        %v380 = vmax.f32 %v347, 0.0
        %v381 = vmax.f32 %v349, 0.0
        %v382 = vmax.f32 %v352, 0.0
        %v383 = vmax.f32 %v354, 0.0
        %v384 = vmax.f32 %v357, 0.0
        %v385 = vmax.f32 %v359, 0.0
        %v386 = vmax.f32 %v362, 0.0
        %v387 = vmax.f32 %v364, 0.0
        %v388 = vmax.f32 %v367, 0.0
        %v389 = vmax.f32 %v369, 0.0
        %v390 = vmax.f32 %v372, 0.0
        %v391 = vmax.f32 %v374, 0.0
        %v392 = vpack.c.bf16 %v376, %v376
        %v393 = vpack.c.bf16 %v377, %v377
        %v394 = vpack.c.bf16 %v378, %v378
        %v395 = vpack.c.bf16 %v379, %v379
        %v396 = vpack.c.bf16 %v380, %v380
        %v397 = vpack.c.bf16 %v381, %v381
        %v398 = vpack.c.bf16 %v382, %v382
        %v399 = vpack.c.bf16 %v383, %v383
        %v400 = vpack.c.bf16 %v384, %v384
        %v401 = vpack.c.bf16 %v385, %v385
        %v402 = vpack.c.bf16 %v386, %v386
        %v403 = vpack.c.bf16 %v387, %v387
        %v404 = vpack.c.bf16 %v388, %v388
        %v405 = vpack.c.bf16 %v389, %v389
        %v406 = vpack.c.bf16 %v390, %v390
        %v407 = vpack.c.bf16 %v391, %v391
        %408 = vst [vmem:[%s202] sm:$0xf] %v392
        %409 = vst [vmem:[%s202 + $0x4] sm:$0xf] %v393
        %410 = vst [vmem:[%s202 + $0x8] sm:$0xf] %v394
        %411 = vst [vmem:[%s202 + $0xc] sm:$0xf] %v395
        %412 = vst [vmem:[%s202 + $0x10] sm:$0xf] %v396
        %413 = vst [vmem:[%s202 + $0x14] sm:$0xf] %v397
        %414 = vst [vmem:[%s202 + $0x18] sm:$0xf] %v398
        %415 = vst [vmem:[%s202 + $0x1c] sm:$0xf] %v399
        %416 = vst [vmem:[%s202 + $0x20] sm:$0xf] %v400
        %417 = vst [vmem:[%s202 + $0x24] sm:$0xf] %v401
        %418 = vst [vmem:[%s202 + $0x28] sm:$0xf] %v402
        %419 = vst [vmem:[%s202 + $0x2c] sm:$0xf] %v403
        %420 = vst [vmem:[%s202 + $0x30] sm:$0xf] %v404
        %421 = vst [vmem:[%s202 + $0x34] sm:$0xf] %v405
        %422 = vst [vmem:[%s202 + $0x38] sm:$0xf] %v406
        %423 = vst [vmem:[%s202 + $0x3c] sm:$0xf] %v407
        %s424 = sand.u32 %s117, 1
        %s425 = scalar_lea.sflag [#allocation3], %s424
        %s426 = sand.u32 %s117, 1
        %s427 = smul.addr %s426, 64
        %s428 = scalar_lea.vmem [#allocation2], %s427
        // Predicated region
        $region33: #{tpu_custom_call.1} parent=31 // pred_check
          %p429 = pneg %p127
        $region34: #{tpu_custom_call.1} parent=31 // pred_check_branch
          %431 = sbr.rel (%p429) target = $region36
        $region35: #{tpu_custom_call.1} parent=31 // pred_region
          %s432 = smul.u32 16, %s21
          %434 = vsyncadd %s425, 0
          %s435 = sadd.s32 %s22, %s432
          %s436 = smul.addr %s435, 4
          %s437 = scalar_lea.hbm %s3, %s436
          %s438 = sshll.u32 %s428, 4
          %s439 = int_to_ptr.vmem [resolvable:$true] %s438
          %s440 = sshll.u32 %s437, 4
          %s441 = int_to_ptr.hbm [resolvable:$true] %s440
          %446 = dma.vmem_to_hbm [thread:$0]  %s439, 1024, %s441, %s425, 64, 64, 4
        $region36: #{tpu_custom_call.1} parent=31 // pred_fallthru
          _
      $region32: #{tpu_custom_call.1} parent=5 // pred_fallthru
        _
      %p447 = scmp.le.s32.totalorder 2, %s12
      // Predicated region
      $region37: #{tpu_custom_call.1} parent=5 // pred_check
        %p448 = pneg %p447
      $region38: #{tpu_custom_call.1} parent=5 // pred_check_branch
        %450 = sbr.rel (%p448) target = $region40
      $region39: #{tpu_custom_call.1} parent=5 // pred_region
        %s451 = ssub.s32 %s12, 2
        // Predicated region
        $region41: #{tpu_custom_call.1} parent=39 // pred_check
          %p452 = pneg %p133
        $region42: #{tpu_custom_call.1} parent=39 // pred_check_branch
          %454 = sbr.rel (%p452) target = $region44
        $region43: #{tpu_custom_call.1} parent=39 // pred_region
          %s455 = sand.u32 %s118, 1
          %s456 = scalar_lea.sflag [#allocation3], %s455
          %s457 = sand.u32 %s118, 1
          %s458 = smul.addr %s457, 64
          %s459 = scalar_lea.vmem [#allocation2], %s458
          %461 = dma.done %s456, 1024
        $region44: #{tpu_custom_call.1} parent=39 // pred_fallthru
          _
      $region40: #{tpu_custom_call.1} parent=5 // pred_fallthru
        _
    $region6: #{tpu_custom_call.1} parent=1 // loop_footer
      %s16 = sadd.s32 1, %s12
    $region7: #{tpu_custom_call.1} parent=1 // loop_footer_branch
      %11 = sbr.rel target = $region3
    $region8: #{tpu_custom_call.1} parent=1 // loop_exit
      _
    %462 = vsyncpa [#allocation3], 1
    %s463 = scalar_lea.sflag [#allocation3], 1
    %464 = vsyncpa %s463, 1

</llo_original>
